<compile_context>
chip_gen: v5e
topology: v5e:2x2
jax: 0.10.0
libtpu: 0.0.40
codegen_flags: <defaults>
</compile_context>

<pallas_src>
import jax
import jax.numpy as jnp
from jax.experimental import pallas as pl
from jax.experimental.pallas import tpu as pltpu


# ---------------------------------------------------------------------------
# Kernel 1: hoisted input projection   XP = X @ Wx + b      (one big matmul)
# ---------------------------------------------------------------------------
def xproj_kernel(x_ref, wx_ref, b_ref, out_ref):
    acc = jnp.dot(x_ref[...], wx_ref[...], preferred_element_type=jnp.float32)
    out_ref[...] = (acc + b_ref[...]).astype(out_ref.dtype)


def relu_lstm_xproj(x_flat, wx, b, *, tm=256, vmem_limit_bytes=None):
    """x_flat: [T*B, D], wx: [D, 4H], b: [1, 4H] -> [T*B, 4H] (float32)."""
    TB, D = x_flat.shape
    fourH = wx.shape[1]
    tm = min(tm, TB)
    grid = (pl.cdiv(TB, tm),)
    return pl.pallas_call(
        xproj_kernel,
        out_shape=jax.ShapeDtypeStruct((TB, fourH), jnp.float32),
        grid=grid,
        in_specs=[
            pl.BlockSpec((tm, D), lambda i: (i, 0)),
            pl.BlockSpec((D, fourH), lambda i: (0, 0)),   # weights resident
            pl.BlockSpec((1, fourH), lambda i: (0, 0)),   # bias resident
        ],
        out_specs=pl.BlockSpec((tm, fourH), lambda i: (i, 0)),
        compiler_params=pltpu.CompilerParams(
            dimension_semantics=("parallel",),            # v7x: both TCs
            vmem_limit_bytes=vmem_limit_bytes),
    )(x_flat, wx, b)


# ---------------------------------------------------------------------------
# Kernel 2: recurrence over T steps.  Only h @ Wh on the MXU per step; Wh and
# the initial state are VMEM-resident; h/c live in VMEM scratch across steps.
# ---------------------------------------------------------------------------
def relu_lstm_seq_kernel(xp_ref, wh_ref, h0_ref, c0_ref,
                         h_out_ref, c_out_ref, h_scr, c_scr):
    t = pl.program_id(0)

    @pl.when(t == 0)
    def _():
        h_scr[...] = h0_ref[...].astype(jnp.float32)
        c_scr[...] = c0_ref[...].astype(jnp.float32)

    h = h_scr[...]                                    # [B, H]  f32 carry
    c = c_scr[...]                                    # [B, H]  f32 carry

    # gates = (x_t @ Wx + b)  [precomputed]  +  h @ Wh      -> [B, 4H] f32
    gates = xp_ref[0] + jnp.dot(h.astype(wh_ref.dtype), wh_ref[...],
                                preferred_element_type=jnp.float32)

    H = h.shape[-1]                                   # lane-aligned slices
    f = jnp.maximum(gates[:, 0 * H:1 * H], 0.0)       # ReLU forget gate
    i = jnp.maximum(gates[:, 1 * H:2 * H], 0.0)       # ReLU input gate
    o = jnp.maximum(gates[:, 2 * H:3 * H], 0.0)       # ReLU output gate
    c_tilde = jnp.tanh(gates[:, 3 * H:4 * H])         # candidate cell

    c_new = f * c + i * c_tilde
    h_new = o * jnp.tanh(c_new)

    h_scr[...] = h_new                                # carry to next step
    c_scr[...] = c_new
    h_out_ref[0] = h_new.astype(h_out_ref.dtype)      # lane-dense store
    c_out_ref[0] = c_new.astype(c_out_ref.dtype)


def relu_lstm_sequence(xs, h0, c0, wx, wh, b, *,
                       matmul_dtype=jnp.float32, vmem_limit_bytes=None):
    """Run T ReLULSTM steps (== calling the PyTorch forward T times).

    xs: [T, B, D], h0/c0: [B, H], wx: [D, 4H], wh: [H, 4H], b: [1, 4H]
    returns (h_seq, c_seq), each [T, B, H] float32.
    """
    T, B, D = xs.shape
    H = h0.shape[-1]

    # --- hoisted, well-shaped input projection (one matmul for all steps) ---
    x_flat = xs.reshape(T * B, D).astype(matmul_dtype)
    wx_m = wx.astype(matmul_dtype)
    wh_m = wh.astype(matmul_dtype)
    xp = relu_lstm_xproj(x_flat, wx_m, b,
                         vmem_limit_bytes=vmem_limit_bytes
                         ).reshape(T, B, 4 * H)

    # --- recurrent sequence kernel ------------------------------------------
    h_seq, c_seq = pl.pallas_call(
        relu_lstm_seq_kernel,
        out_shape=(jax.ShapeDtypeStruct((T, B, H), jnp.float32),
                   jax.ShapeDtypeStruct((T, B, H), jnp.float32)),
        grid=(T,),
        in_specs=[
            pl.BlockSpec((1, B, 4 * H), lambda t: (t, 0, 0)),  # stream x-proj
            pl.BlockSpec((H, 4 * H), lambda t: (0, 0)),        # Wh resident
            pl.BlockSpec((B, H), lambda t: (0, 0)),            # h0 resident
            pl.BlockSpec((B, H), lambda t: (0, 0)),            # c0 resident
        ],
        out_specs=(pl.BlockSpec((1, B, H), lambda t: (t, 0, 0)),
                   pl.BlockSpec((1, B, H), lambda t: (t, 0, 0))),
        scratch_shapes=[pltpu.VMEM((B, H), jnp.float32),       # h carry
                        pltpu.VMEM((B, H), jnp.float32)],      # c carry
        compiler_params=pltpu.CompilerParams(
            dimension_semantics=("arbitrary",),                # recurrence
            vmem_limit_bytes=vmem_limit_bytes),
    )(xp, wh_m, h0, c0)
    return h_seq, c_seq


def relu_lstm_step(x, h, c, wx, wh, b, **kwargs):
    """Single forward step (matches one call of the PyTorch module forward)."""
    h_seq, c_seq = relu_lstm_sequence(x[None], h, c, wx, wh, b, **kwargs)
    return h_seq[0], c_seq[0]


# ---------------------------------------------------------------------------
# Parameters + pure-JAX reference
# ---------------------------------------------------------------------------
def make_params(key, input_size, hidden_size):
    """Synthetic params matching the PyTorch module (Linear weight is
    [out, in]); transposed and stacked along 4H in order (f, i, o, c_tilde)."""
    ks = jax.random.split(key, 12)
    D, H = input_size, hidden_size

    def lin_w(k, fan_in):
        return jax.random.normal(k, (H, fan_in), jnp.float32) * 0.1

    def lin_b(k):
        return jax.random.normal(k, (H,), jnp.float32) * 0.1

    w_fx, w_ix, w_ox, w_cx = (lin_w(ks[j], D) for j in range(4))
    w_fh, w_ih, w_oh, w_ch = (lin_w(ks[4 + j], H) for j in range(4))
    b_fx, b_ix, b_ox, b_cx = (lin_b(ks[8 + j]) for j in range(4))

    wx = jnp.concatenate([w_fx.T, w_ix.T, w_ox.T, w_cx.T], axis=1)  # [D, 4H]
    wh = jnp.concatenate([w_fh.T, w_ih.T, w_oh.T, w_ch.T], axis=1)  # [H, 4H]
    b = jnp.concatenate([b_fx, b_ix, b_ox, b_cx])[None, :]          # [1, 4H]
    return wx, wh, b


def reference_sequence(xs, h0, c0, wx, wh, b):
    H = h0.shape[-1]

    def step(carry, x):
        h, c = carry
        gates = x @ wx + h @ wh + b
        f = jax.nn.relu(gates[:, 0 * H:1 * H])
        i = jax.nn.relu(gates[:, 1 * H:2 * H])
        o = jax.nn.relu(gates[:, 2 * H:3 * H])
        c_tilde = jnp.tanh(gates[:, 3 * H:4 * H])
        c = f * c + i * c_tilde
        h = o * jnp.tanh(c)
        return (h, c), (h, c)

    _, (hs, cs) = jax.lax.scan(step, (h0, c0), xs)
    return hs, cs


if __name__ == "__main__":
    seq_len = 8
    batch = 8
    input_size = 64
    hidden_size = 128   # multiple of 128 -> lane-aligned gates / full-lane stores

    key = jax.random.PRNGKey(0)
    k_x, k_p = jax.random.split(key)

    xs = jax.random.normal(k_x, (seq_len, batch, input_size), jnp.float32)
    h0 = jnp.zeros((batch, hidden_size), jnp.float32)   # init_hidden(batch)
    c0 = jnp.zeros((batch, hidden_size), jnp.float32)

    wx, wh, b = make_params(k_p, input_size, hidden_size)

    # f32 matmul path.
    h_seq, c_seq = relu_lstm_sequence(xs, h0, c0, wx, wh, b,
                                      matmul_dtype=jnp.float32)
    jax.block_until_ready((h_seq, c_seq))

    h_ref, c_ref = reference_sequence(xs, h0, c0, wx, wh, b)
    assert jnp.allclose(h_seq, h_ref, atol=1e-4, rtol=1e-4)
    assert jnp.allclose(c_seq, c_ref, atol=1e-4, rtol=1e-4)

    # Single-step wrapper (one PyTorch forward() call).
    h1, c1 = relu_lstm_step(xs[0], h0, c0, wx, wh, b)
    jax.block_until_ready((h1, c1))
    assert jnp.allclose(h1, h_ref[0], atol=1e-4, rtol=1e-4)
    assert jnp.allclose(c1, c_ref[0], atol=1e-4, rtol=1e-4)

    # bf16 matmul operands (f32 accumulation and f32 cell update).
    h_bf, c_bf = relu_lstm_sequence(xs, h0, c0, wx, wh, b,
                                    matmul_dtype=jnp.bfloat16)
    jax.block_until_ready((h_bf, c_bf))
    assert jnp.allclose(h_bf, h_ref, atol=1e-1, rtol=1e-1)
    assert jnp.allclose(c_bf, c_ref, atol=1e-1, rtol=1e-1)

    print("KERNEL_OK")
</pallas_src>

<mosaic_0001>
module attributes {stable_mosaic.version = 11 : i64} {
  func.func @xproj_kernel(%arg0: i32, %arg1: memref<64x64xf32, #tpu.memory_space<vmem>>, %arg2: memref<64x512xf32, #tpu.memory_space<vmem>>, %arg3: memref<1x512xf32, #tpu.memory_space<vmem>>, %arg4: memref<64x512xf32, #tpu.memory_space<vmem>>) attributes {dimension_semantics = [#tpu.dimension_semantics<parallel>], iteration_bounds = array<i64: 1>, scalar_prefetch = 0 : i64, scratch_operands = 0 : i64, tpu.core_type = #tpu.core_type<tc>, window_params = [{transform_indices = @transform_0, window_bounds = array<i64: 64, 64>}, {pipeline_mode = #tpu.pipeline_mode<synchronous>, transform_indices = @transform_1, window_bounds = array<i64: 64, 512>}, {pipeline_mode = #tpu.pipeline_mode<synchronous>, transform_indices = @transform_2, window_bounds = array<i64: 1, 512>}, {transform_indices = @transform_3, window_bounds = array<i64: 64, 512>}]} {
    %c0 = arith.constant 0 : index
    %c0_0 = arith.constant 0 : index
    %0 = vector.load %arg1[%c0, %c0_0] : memref<64x64xf32, #tpu.memory_space<vmem>>, vector<64x64xf32>
    %c0_1 = arith.constant 0 : index
    %c0_2 = arith.constant 0 : index
    %1 = vector.load %arg2[%c0_1, %c0_2] : memref<64x512xf32, #tpu.memory_space<vmem>>, vector<64x512xf32>
    %cst = arith.constant dense<0.000000e+00> : vector<64x512xf32>
    %2 = tpu.matmul %0, %1, %cst {dimension_numbers = #tpu.dot_dimension_numbers<[1], [0], [0], [1], [0, 0, 1, 1], [], []>} : vector<64x64xf32>, vector<64x512xf32>, vector<64x512xf32> -> vector<64x512xf32>
    %c0_3 = arith.constant 0 : index
    %c0_4 = arith.constant 0 : index
    %3 = vector.load %arg3[%c0_3, %c0_4] : memref<1x512xf32, #tpu.memory_space<vmem>>, vector<1x512xf32>
    %4 = vector.broadcast %3 : vector<1x512xf32> to vector<64x512xf32>
    %5 = arith.addf %2, %4 : vector<64x512xf32>
    %c0_5 = arith.constant 0 : index
    %c0_6 = arith.constant 0 : index
    %6 = vector.load %arg4[%c0_5, %c0_6] : memref<64x512xf32, #tpu.memory_space<vmem>>, vector<64x512xf32>
    tpu.vector_store %arg4[%c0_5, %c0_6], %5 {strides = array<i32>} : memref<64x512xf32, #tpu.memory_space<vmem>>, vector<64x512xf32>,
    return
  }
  func.func @transform_0(%arg0: i32) -> (i32, i32) {
    %c0_i32 = arith.constant 0 : i32
    %c0_i32_0 = arith.constant 0 : i32
    return %arg0, %c0_i32 : i32, i32
  }
  func.func @transform_1(%arg0: i32) -> (i32, i32) {
    %c0_i32 = arith.constant 0 : i32
    %c0_i32_0 = arith.constant 0 : i32
    %c0_i32_1 = arith.constant 0 : i32
    return %c0_i32, %c0_i32_0 : i32, i32
  }
  func.func @transform_2(%arg0: i32) -> (i32, i32) {
    %c0_i32 = arith.constant 0 : i32
    %c0_i32_0 = arith.constant 0 : i32
    %c0_i32_1 = arith.constant 0 : i32
    return %c0_i32, %c0_i32_0 : i32, i32
  }
  func.func @transform_3(%arg0: i32) -> (i32, i32) {
    %c0_i32 = arith.constant 0 : i32
    %c0_i32_0 = arith.constant 0 : i32
    return %arg0, %c0_i32 : i32, i32
  }
}

</mosaic_0001>

<llo_original>
// kernel: tpu_custom_call.1
$region0: #{tpu_custom_call.1}
  #allocation0 [shape = 'u32[]', space=smem, size = 0x4, offset = 0x4, fixed_abs, tag = 'smem constant byte address 0x4 - core index']
  #allocation1 [shape = 'u32[72,128]{1,0:T(1,128)}', space=vmem, size = 0x9000, scoped, tag = 'internal scratch']
  %s0 = inlined_call_operand.hbm [shape: f32[64,64], index: 0, kind: input, shape index: {}]
  %s1 = inlined_call_operand.hbm [shape: f32[64,512], index: 1, kind: input, shape index: {}]
  %s2 = inlined_call_operand.hbm [shape: f32[1,512], index: 2, kind: input, shape index: {}]
  %s3 = inlined_call_operand.hbm [shape: f32[64,512], index: 3, kind: output, shape index: {}]
  %s4 = sld [smem:[#allocation0]]
  $region34: #{tpu_custom_call.1} parent=0
    _
  %s6 = ssub.s32 1, %s4
  %s7 = scalar_select 0, %s6, %s4
  $region1: #{tpu_custom_call.1} parent=0
    #allocation2 [shape = 'u8[32768]{0}', space=vmem, size = 0x8000, scoped, tag = 'input window, operand 0, single buffered']
    #allocation3 [shape = 's32[1]{0}', space=sflag, size = 0x4, scoped, tag = 'scoped memory for tpu_custom_call.1']
    #allocation4 [shape = 's32[1]{0}', space=sflag, size = 0x4, scoped, tag = 'scoped memory for tpu_custom_call.1']
    #allocation5 [shape = 'u8[131072]{0}', space=vmem, size = 0x20000, scoped, tag = 'input window, operand 1, single buffered']
    #allocation6 [shape = 's32[1]{0}', space=sflag, size = 0x4, scoped, tag = 'scoped memory for tpu_custom_call.1']
    #allocation7 [shape = 'u8[2048]{0}', space=vmem, size = 0x800, scoped, tag = 'input window, operand 2, single buffered']
    #allocation8 [shape = 'u8[131072]{0}', space=vmem, size = 0x20000, scoped, tag = 'output window, operand 0, single buffered']
    %8 = vsyncpa [#allocation3], 0
    %9 = vsyncpa [#allocation6], 0
    %10 = vsyncpa [#allocation4], 0
    // Predicated region
    $region2: #{tpu_custom_call.1} parent=1 // pred_check
      _
    $region3: #{tpu_custom_call.1} parent=1 // pred_check_branch
      %12 = sbr.rel (0) target = $region5
    $region4: #{tpu_custom_call.1} parent=1 // pred_region
      %14 = vsyncadd [#allocation3], 0
      %s15 = sshll.u32 %s0, 4
      %s16 = int_to_ptr.hbm [resolvable:$true] %s15
      %s17 = sshll.u32 [#allocation2], 4
      %s18 = int_to_ptr.vmem [resolvable:$true] %s17
      %23 = dma.hbm_to_vmem [thread:$0]  %s16, 1024, %s18, [#allocation3], 128, 128, 8
    $region5: #{tpu_custom_call.1} parent=1 // pred_fallthru
      _
    // Predicated region
    $region6: #{tpu_custom_call.1} parent=1 // pred_check
      _
    $region7: #{tpu_custom_call.1} parent=1 // pred_check_branch
      %25 = sbr.rel (0) target = $region9
    $region8: #{tpu_custom_call.1} parent=1 // pred_region
      %27 = vsyncadd [#allocation6], 0
      %s28 = sshll.u32 %s1, 4
      %s29 = int_to_ptr.hbm [resolvable:$true] %s28
      %s30 = sshll.u32 [#allocation5], 4
      %s31 = int_to_ptr.vmem [resolvable:$true] %s30
      %36 = dma.hbm_to_vmem [thread:$0]  %s29, 4096, %s31, [#allocation6], 512, 512, 32
    $region9: #{tpu_custom_call.1} parent=1 // pred_fallthru
      _
    // Predicated region
    $region10: #{tpu_custom_call.1} parent=1 // pred_check
      _
    $region11: #{tpu_custom_call.1} parent=1 // pred_check_branch
      %38 = sbr.rel (0) target = $region13
    $region12: #{tpu_custom_call.1} parent=1 // pred_region
      %40 = vsyncadd [#allocation6], 0
      %s42 = sshll.u32 %s2, 4
      %s43 = int_to_ptr.hbm [resolvable:$true] %s42
      %s44 = sshll.u32 [#allocation7], 4
      %s45 = int_to_ptr.vmem [resolvable:$true] %s44
      %47 = dma.hbm_to_vmem [thread:$0]  %s43, 64, %s45, [#allocation6]
    $region13: #{tpu_custom_call.1} parent=1 // pred_fallthru
      _
    // Predicated region
    $region14: #{tpu_custom_call.1} parent=1 // pred_check
      _
    $region15: #{tpu_custom_call.1} parent=1 // pred_check_branch
      %49 = sbr.rel (0) target = $region17
    $region16: #{tpu_custom_call.1} parent=1 // pred_region
      %51 = dma.done [#allocation3], 1024
    $region17: #{tpu_custom_call.1} parent=1 // pred_fallthru
      _
    // Predicated region
    $region18: #{tpu_custom_call.1} parent=1 // pred_check
      _
    $region19: #{tpu_custom_call.1} parent=1 // pred_check_branch
      %53 = sbr.rel (0) target = $region21
    $region20: #{tpu_custom_call.1} parent=1 // pred_region
      %55 = dma.done [#allocation6], 4096
    $region21: #{tpu_custom_call.1} parent=1 // pred_fallthru
      _
    // Predicated region
    $region22: #{tpu_custom_call.1} parent=1 // pred_check
      _
    $region23: #{tpu_custom_call.1} parent=1 // pred_check_branch
      %57 = sbr.rel (0) target = $region25
    $region24: #{tpu_custom_call.1} parent=1 // pred_region
      %59 = dma.done [#allocation6], 64
    $region25: #{tpu_custom_call.1} parent=1 // pred_fallthru
      _
    %v60 = vld [vmem:[#allocation2] sm:$0xff]
    %v61 = vld [vmem:[#allocation2 + $0x8] sm:$0xff]
    %v62 = vld [vmem:[#allocation2 + $0x10] sm:$0xff]
    %v63 = vld [vmem:[#allocation2 + $0x18] sm:$0xff]
    %v64 = vld [vmem:[#allocation2 + $0x20] sm:$0xff]
    %v65 = vld [vmem:[#allocation2 + $0x28] sm:$0xff]
    %v66 = vld [vmem:[#allocation2 + $0x30] sm:$0xff]
    %v67 = vld [vmem:[#allocation2 + $0x38] sm:$0xff]
    %v68 = vld [vmem:[#allocation5] sm:$0xff]
    %v69 = vld [vmem:[#allocation5 + $0x8] sm:$0xff]
    %v70 = vld [vmem:[#allocation5 + $0x10] sm:$0xff]
    %v71 = vld [vmem:[#allocation5 + $0x18] sm:$0xff]
    %v72 = vld [vmem:[#allocation5 + $0x20] sm:$0xff]
    %v73 = vld [vmem:[#allocation5 + $0x28] sm:$0xff]
    %v74 = vld [vmem:[#allocation5 + $0x30] sm:$0xff]
    %v75 = vld [vmem:[#allocation5 + $0x38] sm:$0xff]
    %v76 = vld [vmem:[#allocation5 + $0x40] sm:$0xff]
    %v77 = vld [vmem:[#allocation5 + $0x48] sm:$0xff]
    %v78 = vld [vmem:[#allocation5 + $0x50] sm:$0xff]
    %v79 = vld [vmem:[#allocation5 + $0x58] sm:$0xff]
    %v80 = vld [vmem:[#allocation5 + $0x60] sm:$0xff]
    %v81 = vld [vmem:[#allocation5 + $0x68] sm:$0xff]
    %v82 = vld [vmem:[#allocation5 + $0x70] sm:$0xff]
    %v83 = vld [vmem:[#allocation5 + $0x78] sm:$0xff]
    %v84 = vld [vmem:[#allocation5 + $0x80] sm:$0xff]
    %v85 = vld [vmem:[#allocation5 + $0x88] sm:$0xff]
    %v86 = vld [vmem:[#allocation5 + $0x90] sm:$0xff]
    %v87 = vld [vmem:[#allocation5 + $0x98] sm:$0xff]
    %v88 = vld [vmem:[#allocation5 + $0xa0] sm:$0xff]
    %v89 = vld [vmem:[#allocation5 + $0xa8] sm:$0xff]
    %v90 = vld [vmem:[#allocation5 + $0xb0] sm:$0xff]
    %v91 = vld [vmem:[#allocation5 + $0xb8] sm:$0xff]
    %v92 = vld [vmem:[#allocation5 + $0xc0] sm:$0xff]
    %v93 = vld [vmem:[#allocation5 + $0xc8] sm:$0xff]
    %v94 = vld [vmem:[#allocation5 + $0xd0] sm:$0xff]
    %v95 = vld [vmem:[#allocation5 + $0xd8] sm:$0xff]
    %v96 = vld [vmem:[#allocation5 + $0xe0] sm:$0xff]
    %v97 = vld [vmem:[#allocation5 + $0xe8] sm:$0xff]
    %v98 = vld [vmem:[#allocation5 + $0xf0] sm:$0xff]
    %v99 = vld [vmem:[#allocation5 + $0xf8] sm:$0xff]
    %v100 = vld [vmem:[#allocation7] sm:$0xf]
    %v102 = vperm.slane %v100, 0
    %v103 = vperm.slane %v100, 1
    %v104 = vperm.slane %v100, 2
    %v105 = vperm.slane %v100, 3
    %vm110 = vcmask 523264
    %v112 = vsel %vm110, %v60, 0
    %v115 = vsel %vm110, %v61, 0
    %v118 = vsel %vm110, %v62, 0
    %v121 = vsel %vm110, %v63, 0
    %v124 = vsel %vm110, %v64, 0
    %v127 = vsel %vm110, %v65, 0
    %v130 = vsel %vm110, %v66, 0
    %v133 = vsel %vm110, %v67, 0
    %135 = vmatpush.msra.mxu0 0.0
    %136 = vmatpush.msra.mxu0 0.0
    %137 = vmatpush.msra.mxu0 0.0
    %138 = vmatpush.msra.mxu0 0.0
    %139 = vmatpush.msra.mxu0 0.0
    %140 = vmatpush.msra.mxu0 0.0
    %141 = vmatpush.msra.mxu0 0.0
    %142 = vmatpush.msra.mxu0 0.0
    %143 = vmatpush.msra.mxu0 %v96
    %144 = vmatpush.msra.mxu0 %v92
    %145 = vmatpush.msra.mxu0 %v88
    %146 = vmatpush.msra.mxu0 %v84
    %147 = vmatpush.msra.mxu0 %v80
    %148 = vmatpush.msra.mxu0 %v76
    %149 = vmatpush.msra.mxu0 %v72
    %150 = vmatpush.msra.mxu0 %v68
    %151 = vmatmul.f32.gmra.mxu0 %v112
    %v152 = vpop.f32.mrf.mxu0
    %v153 = vadd.f32 %v102, %v152
    %154 = vmatmul.f32.gmra.mxu0 %v115
    %v155 = vpop.f32.mrf.mxu0
    %v156 = vadd.f32 %v102, %v155
    %157 = vmatmul.f32.gmra.mxu0 %v118
    %v158 = vpop.f32.mrf.mxu0
    %v159 = vadd.f32 %v102, %v158
    %160 = vmatmul.f32.gmra.mxu0 %v121
    %v161 = vpop.f32.mrf.mxu0
    %v162 = vadd.f32 %v102, %v161
    %163 = vmatmul.f32.gmra.mxu0 %v124
    %v164 = vpop.f32.mrf.mxu0
    %v165 = vadd.f32 %v102, %v164
    %166 = vmatmul.f32.gmra.mxu0 %v127
    %v167 = vpop.f32.mrf.mxu0
    %v168 = vadd.f32 %v102, %v167
    %169 = vmatmul.f32.gmra.mxu0 %v130
    %v170 = vpop.f32.mrf.mxu0
    %v171 = vadd.f32 %v102, %v170
    %172 = vmatmul.f32.gmra.mxu0 %v133
    %v173 = vpop.f32.mrf.mxu0
    %v174 = vadd.f32 %v102, %v173
    %175 = vdwg.mxu0
    %176 = vmatpush.msra.mxu0 0.0
    %177 = vmatpush.msra.mxu0 0.0
    %178 = vmatpush.msra.mxu0 0.0
    %179 = vmatpush.msra.mxu0 0.0
    %180 = vmatpush.msra.mxu0 0.0
    %181 = vmatpush.msra.mxu0 0.0
    %182 = vmatpush.msra.mxu0 0.0
    %183 = vmatpush.msra.mxu0 0.0
    %184 = vmatpush.msra.mxu0 %v97
    %185 = vmatpush.msra.mxu0 %v93
    %186 = vmatpush.msra.mxu0 %v89
    %187 = vmatpush.msra.mxu0 %v85
    %188 = vmatpush.msra.mxu0 %v81
    %189 = vmatpush.msra.mxu0 %v77
    %190 = vmatpush.msra.mxu0 %v73
    %191 = vmatpush.msra.mxu0 %v69
    %192 = vmatmul.f32.gmra.mxu0 %v112
    %v193 = vpop.f32.mrf.mxu0
    %v194 = vadd.f32 %v103, %v193
    %195 = vmatmul.f32.gmra.mxu0 %v115
    %v196 = vpop.f32.mrf.mxu0
    %v197 = vadd.f32 %v103, %v196
    %198 = vmatmul.f32.gmra.mxu0 %v118
    %v199 = vpop.f32.mrf.mxu0
    %v200 = vadd.f32 %v103, %v199
    %201 = vmatmul.f32.gmra.mxu0 %v121
    %v202 = vpop.f32.mrf.mxu0
    %v203 = vadd.f32 %v103, %v202
    %204 = vmatmul.f32.gmra.mxu0 %v124
    %v205 = vpop.f32.mrf.mxu0
    %v206 = vadd.f32 %v103, %v205
    %207 = vmatmul.f32.gmra.mxu0 %v127
    %v208 = vpop.f32.mrf.mxu0
    %v209 = vadd.f32 %v103, %v208
    %210 = vmatmul.f32.gmra.mxu0 %v130
    %v211 = vpop.f32.mrf.mxu0
    %v212 = vadd.f32 %v103, %v211
    %213 = vmatmul.f32.gmra.mxu0 %v133
    %v214 = vpop.f32.mrf.mxu0
    %v215 = vadd.f32 %v103, %v214
    %216 = vdwg.mxu0
    %217 = vmatpush.msra.mxu0 0.0
    %218 = vmatpush.msra.mxu0 0.0
    %219 = vmatpush.msra.mxu0 0.0
    %220 = vmatpush.msra.mxu0 0.0
    %221 = vmatpush.msra.mxu0 0.0
    %222 = vmatpush.msra.mxu0 0.0
    %223 = vmatpush.msra.mxu0 0.0
    %224 = vmatpush.msra.mxu0 0.0
    %225 = vmatpush.msra.mxu0 %v98
    %226 = vmatpush.msra.mxu0 %v94
    %227 = vmatpush.msra.mxu0 %v90
    %228 = vmatpush.msra.mxu0 %v86
    %229 = vmatpush.msra.mxu0 %v82
    %230 = vmatpush.msra.mxu0 %v78
    %231 = vmatpush.msra.mxu0 %v74
    %232 = vmatpush.msra.mxu0 %v70
    %233 = vmatmul.f32.gmra.mxu0 %v112
    %v234 = vpop.f32.mrf.mxu0
    %v235 = vadd.f32 %v104, %v234
    %236 = vmatmul.f32.gmra.mxu0 %v115
    %v237 = vpop.f32.mrf.mxu0
    %v238 = vadd.f32 %v104, %v237
    %239 = vmatmul.f32.gmra.mxu0 %v118
    %v240 = vpop.f32.mrf.mxu0
    %v241 = vadd.f32 %v104, %v240
    %242 = vmatmul.f32.gmra.mxu0 %v121
    %v243 = vpop.f32.mrf.mxu0
    %v244 = vadd.f32 %v104, %v243
    %245 = vmatmul.f32.gmra.mxu0 %v124
    %v246 = vpop.f32.mrf.mxu0
    %v247 = vadd.f32 %v104, %v246
    %248 = vmatmul.f32.gmra.mxu0 %v127
    %v249 = vpop.f32.mrf.mxu0
    %v250 = vadd.f32 %v104, %v249
    %251 = vmatmul.f32.gmra.mxu0 %v130
    %v252 = vpop.f32.mrf.mxu0
    %v253 = vadd.f32 %v104, %v252
    %254 = vmatmul.f32.gmra.mxu0 %v133
    %v255 = vpop.f32.mrf.mxu0
    %v256 = vadd.f32 %v104, %v255
    %257 = vdwg.mxu0
    %258 = vmatpush.msra.mxu0 0.0
    %259 = vmatpush.msra.mxu0 0.0
    %260 = vmatpush.msra.mxu0 0.0
    %261 = vmatpush.msra.mxu0 0.0
    %262 = vmatpush.msra.mxu0 0.0
    %263 = vmatpush.msra.mxu0 0.0
    %264 = vmatpush.msra.mxu0 0.0
    %265 = vmatpush.msra.mxu0 0.0
    %266 = vmatpush.msra.mxu0 %v99
    %267 = vmatpush.msra.mxu0 %v95
    %268 = vmatpush.msra.mxu0 %v91
    %269 = vmatpush.msra.mxu0 %v87
    %270 = vmatpush.msra.mxu0 %v83
    %271 = vmatpush.msra.mxu0 %v79
    %272 = vmatpush.msra.mxu0 %v75
    %273 = vmatpush.msra.mxu0 %v71
    %274 = vmatmul.f32.gmra.mxu0 %v112
    %v275 = vpop.f32.mrf.mxu0
    %v276 = vadd.f32 %v105, %v275
    %277 = vmatmul.f32.gmra.mxu0 %v115
    %v278 = vpop.f32.mrf.mxu0
    %v279 = vadd.f32 %v105, %v278
    %280 = vmatmul.f32.gmra.mxu0 %v118
    %v281 = vpop.f32.mrf.mxu0
    %v282 = vadd.f32 %v105, %v281
    %283 = vmatmul.f32.gmra.mxu0 %v121
    %v284 = vpop.f32.mrf.mxu0
    %v285 = vadd.f32 %v105, %v284
    %286 = vmatmul.f32.gmra.mxu0 %v124
    %v287 = vpop.f32.mrf.mxu0
    %v288 = vadd.f32 %v105, %v287
    %289 = vmatmul.f32.gmra.mxu0 %v127
    %v290 = vpop.f32.mrf.mxu0
    %v291 = vadd.f32 %v105, %v290
    %292 = vmatmul.f32.gmra.mxu0 %v130
    %v293 = vpop.f32.mrf.mxu0
    %v294 = vadd.f32 %v105, %v293
    %295 = vmatmul.f32.gmra.mxu0 %v133
    %v296 = vpop.f32.mrf.mxu0
    %v297 = vadd.f32 %v105, %v296
    %298 = vdwg.mxu0
    %299 = vst [vmem:[#allocation8] sm:$0xff] %v153
    %300 = vst [vmem:[#allocation8 + $0x8] sm:$0xff] %v194
    %301 = vst [vmem:[#allocation8 + $0x10] sm:$0xff] %v235
    %302 = vst [vmem:[#allocation8 + $0x18] sm:$0xff] %v276
    %303 = vst [vmem:[#allocation8 + $0x20] sm:$0xff] %v156
    %304 = vst [vmem:[#allocation8 + $0x28] sm:$0xff] %v197
    %305 = vst [vmem:[#allocation8 + $0x30] sm:$0xff] %v238
    %306 = vst [vmem:[#allocation8 + $0x38] sm:$0xff] %v279
    %307 = vst [vmem:[#allocation8 + $0x40] sm:$0xff] %v159
    %308 = vst [vmem:[#allocation8 + $0x48] sm:$0xff] %v200
    %309 = vst [vmem:[#allocation8 + $0x50] sm:$0xff] %v241
    %310 = vst [vmem:[#allocation8 + $0x58] sm:$0xff] %v282
    %311 = vst [vmem:[#allocation8 + $0x60] sm:$0xff] %v162
    %312 = vst [vmem:[#allocation8 + $0x68] sm:$0xff] %v203
    %313 = vst [vmem:[#allocation8 + $0x70] sm:$0xff] %v244
    %314 = vst [vmem:[#allocation8 + $0x78] sm:$0xff] %v285
    %315 = vst [vmem:[#allocation8 + $0x80] sm:$0xff] %v165
    %316 = vst [vmem:[#allocation8 + $0x88] sm:$0xff] %v206
    %317 = vst [vmem:[#allocation8 + $0x90] sm:$0xff] %v247
    %318 = vst [vmem:[#allocation8 + $0x98] sm:$0xff] %v288
    %319 = vst [vmem:[#allocation8 + $0xa0] sm:$0xff] %v168
    %320 = vst [vmem:[#allocation8 + $0xa8] sm:$0xff] %v209
    %321 = vst [vmem:[#allocation8 + $0xb0] sm:$0xff] %v250
    %322 = vst [vmem:[#allocation8 + $0xb8] sm:$0xff] %v291
    %323 = vst [vmem:[#allocation8 + $0xc0] sm:$0xff] %v171
    %324 = vst [vmem:[#allocation8 + $0xc8] sm:$0xff] %v212
    %325 = vst [vmem:[#allocation8 + $0xd0] sm:$0xff] %v253
    %326 = vst [vmem:[#allocation8 + $0xd8] sm:$0xff] %v294
    %327 = vst [vmem:[#allocation8 + $0xe0] sm:$0xff] %v174
    %328 = vst [vmem:[#allocation8 + $0xe8] sm:$0xff] %v215
    %329 = vst [vmem:[#allocation8 + $0xf0] sm:$0xff] %v256
    %330 = vst [vmem:[#allocation8 + $0xf8] sm:$0xff] %v297
    // Predicated region
    $region26: #{tpu_custom_call.1} parent=1 // pred_check
      _
    $region27: #{tpu_custom_call.1} parent=1 // pred_check_branch
      %332 = sbr.rel (0) target = $region29
    $region28: #{tpu_custom_call.1} parent=1 // pred_region
      %334 = vsyncadd [#allocation4], 0
      %s335 = sshll.u32 [#allocation8], 4
      %s336 = int_to_ptr.vmem [resolvable:$true] %s335
      %s337 = sshll.u32 %s3, 4
      %s338 = int_to_ptr.hbm [resolvable:$true] %s337
      %343 = dma.vmem_to_hbm [thread:$0]  %s336, 4096, %s338, [#allocation4], 512, 512, 32
    $region29: #{tpu_custom_call.1} parent=1 // pred_fallthru
      _
    // Predicated region
    $region30: #{tpu_custom_call.1} parent=1 // pred_check
      _
    $region31: #{tpu_custom_call.1} parent=1 // pred_check_branch
      %345 = sbr.rel (0) target = $region33
    $region32: #{tpu_custom_call.1} parent=1 // pred_region
      %347 = dma.done [#allocation4], 4096
    $region33: #{tpu_custom_call.1} parent=1 // pred_fallthru
      _
    %348 = vsyncpa [#allocation3], 1
    %349 = vsyncpa [#allocation6], 1
    %350 = vsyncpa [#allocation4], 1

</llo_original>
